<compile_context>
chip_gen: v7x
topology: tpu7x:2x2x1
jax: 0.10.0
libtpu: 0.0.40
codegen_flags: <defaults>
</compile_context>

<pallas_src>
import functools

import jax
import jax.numpy as jnp
import numpy as np
from jax import lax
from jax.experimental import pallas as pl
from jax.experimental.pallas import tpu as pltpu  # noqa: F401


def trn_kernel(x_ref, wih_ref, whh_ref, b_ref, wlin_ref, blin_ref, out_ref,
               *, T, B, H):
    # ---- Hoisted, time-parallel input projection: one (T*B, F) @ (F, 4H) matmul ----
    # x_ref is already flattened to (T*B, F) by the wrapper (lane-contiguous tile).
    xw = jnp.dot(x_ref[...], wih_ref[...], preferred_element_type=jnp.float32)
    xw = xw + b_ref[...]                 # combined bias broadcast once, outside the loop

    # ---- Invariant weights loaded once, resident across the recurrence ----
    whh = whh_ref[...]                   # (H, 4H)

    h = jnp.zeros((B, H), jnp.float32)
    c = jnp.zeros((B, H), jnp.float32)

    # Fully unrolled recurrence.  Each xw slab is a static B-row (one sublane tile)
    # slice of the in-register projection -- no VMEM scratch store/load per step.
    # Gate column order is [i, f, o, g] with the g columns pre-scaled by 2 so a
    # single sigmoid over the full (B, 4H) slab covers everything:
    #   tanh(g) = 2 * sigmoid(2g) - 1.
    for t in range(T):
        xw_t = xw[t * B:(t + 1) * B, :]                              # (B, 4H)
        gates = xw_t + jnp.dot(h, whh, preferred_element_type=jnp.float32)
        sig = jax.nn.sigmoid(gates)                                  # one EUP pass, lane-dense
        i_g = sig[:, 0 * H:1 * H]
        f_g = sig[:, 1 * H:2 * H]
        o_g = sig[:, 2 * H:3 * H]
        g_t = 2.0 * sig[:, 3 * H:4 * H] - 1.0                        # tanh(g) fixup (VPU FMA)
        c = f_g * c + i_g * g_t
        h = o_g * jnp.tanh(c)

    # Only the final timestep's linear output is returned (matches the PyTorch forward).
    out_ref[...] = (jnp.dot(h, wlin_ref[...], preferred_element_type=jnp.float32)
                    + blin_ref[...]).astype(out_ref.dtype)


def trn_forward(x, wih_t, whh_t, b, wlin_t, blin):
    """x: (T, B, F); weights pre-transposed, gate-reordered to [i, f, o, g] and
    with the g-gate columns pre-scaled by 2 (see prep_gate_weights)."""
    T, B, F = x.shape
    H = whh_t.shape[0]
    C = wlin_t.shape[1]

    # Wrapper-side flatten: free layout plumbing, avoids in-kernel sublane repacking.
    x_flat = x.reshape(T * B, F)

    flops = (2 * T * B * F * 4 * H          # hoisted input projection
             + 2 * T * B * H * 4 * H        # recurrent matmuls
             + 2 * B * H * C                # final linear
             + 10 * T * B * H)              # elementwise gate math (approx)
    transcendentals = T * B * (4 * H + H)   # sigmoid slab + tanh(c) per step
    bytes_accessed = 4 * (x_flat.size + wih_t.size + whh_t.size + b.size
                          + wlin_t.size + blin.size + B * C)

    kernel = functools.partial(trn_kernel, T=T, B=B, H=H)

    # Single invocation (no grid): all operands are tiny and live fully in VMEM.
    return pl.pallas_call(
        kernel,
        out_shape=jax.ShapeDtypeStruct((B, C), jnp.float32),
        cost_estimate=pl.CostEstimate(flops=flops,
                                      transcendentals=transcendentals,
                                      bytes_accessed=bytes_accessed),
    )(x_flat, wih_t, whh_t, b, wlin_t, blin)


def trn_reference(x, w_ih, w_hh, b_ih, b_hh, w_lin, b_lin):
    """Plain-JAX reference using the ORIGINAL PyTorch weights/gate order [i, f, g, o]."""
    T, B, F = x.shape
    H = w_hh.shape[1]

    def step(carry, x_t):
        h, c = carry
        gates = x_t @ w_ih.T + h @ w_hh.T + b_ih + b_hh
        i_g, f_g, g_g, o_g = jnp.split(gates, 4, axis=-1)
        c_new = jax.nn.sigmoid(f_g) * c + jax.nn.sigmoid(i_g) * jnp.tanh(g_g)
        h_new = jax.nn.sigmoid(o_g) * jnp.tanh(c_new)
        return (h_new, c_new), None

    h0 = jnp.zeros((B, H), jnp.float32)
    c0 = jnp.zeros((B, H), jnp.float32)
    (h_last, _), _ = lax.scan(step, (h0, c0), x)
    return h_last @ w_lin.T + b_lin


if __name__ == "__main__":
    # Small shapes consistent with the module's forward:
    #   T timesteps, batch B, feature dim F, hidden H=64 (fixed in the module), C classes.
    T, B, F, H, C = 8, 8, 32, 64, 16

    key = jax.random.PRNGKey(0)
    ks = jax.random.split(key, 7)
    bound = 1.0 / np.sqrt(H)  # PyTorch LSTMCell / Linear default init scale

    x      = jax.random.normal(ks[0], (T, B, F), jnp.float32)
    w_ih   = jax.random.uniform(ks[1], (4 * H, F), jnp.float32, -bound, bound)
    w_hh   = jax.random.uniform(ks[2], (4 * H, H), jnp.float32, -bound, bound)
    b_ih   = jax.random.uniform(ks[3], (4 * H,),   jnp.float32, -bound, bound)
    b_hh   = jax.random.uniform(ks[4], (4 * H,),   jnp.float32, -bound, bound)
    w_lin  = jax.random.uniform(ks[5], (C, H),     jnp.float32, -bound, bound)
    b_lin  = jax.random.uniform(ks[6], (C,),       jnp.float32, -bound, bound)

    # Host-side glue: reorder PyTorch gate blocks [i, f, g, o] -> [i, f, o, g]
    # (sigmoid gates lane-contiguous) and pre-scale the g block by 2 so the kernel
    # can use a single sigmoid pass and recover tanh(g) = 2*sigmoid(2g) - 1.
    def prep_gate_weights(w):          # split along leading (4H) axis
        i, f, g, o = jnp.split(w, 4, axis=0)
        return jnp.concatenate([i, f, o, 2.0 * g], axis=0)

    wih_t  = prep_gate_weights(w_ih).T                          # (F, 4H)
    whh_t  = prep_gate_weights(w_hh).T                          # (H, 4H)
    b_comb = prep_gate_weights(b_ih + b_hh).reshape(1, 4 * H)   # (1, 4H)
    wlin_t = w_lin.T                                            # (H, C)
    blin   = b_lin.reshape(1, C)                                # (1, C)

    out = trn_forward(x, wih_t, whh_t, b_comb, wlin_t, blin)
    out = jax.block_until_ready(out)

    ref = trn_reference(x, w_ih, w_hh, b_ih, b_hh, w_lin, b_lin)
    np.testing.assert_allclose(np.asarray(out), np.asarray(ref), rtol=1e-5, atol=1e-5)

    print("KERNEL_OK")
</pallas_src>

<mosaic_0001>
module attributes {stable_mosaic.version = 11 : i64} {
  func.func @trn_kernel(%arg0: memref<64x32xf32, #tpu.memory_space<vmem>>, %arg1: memref<32x256xf32, #tpu.memory_space<vmem>>, %arg2: memref<64x256xf32, #tpu.memory_space<vmem>>, %arg3: memref<1x256xf32, #tpu.memory_space<vmem>>, %arg4: memref<64x16xf32, #tpu.memory_space<vmem>>, %arg5: memref<1x16xf32, #tpu.memory_space<vmem>>, %arg6: memref<8x16xf32, #tpu.memory_space<vmem>>) attributes {dimension_semantics = [], scalar_prefetch = 0 : i64, scratch_operands = 0 : i64, tpu.core_type = #tpu.core_type<tc>} {
    %c0 = arith.constant 0 : index
    %c0_0 = arith.constant 0 : index
    %0 = vector.load %arg0[%c0, %c0_0] : memref<64x32xf32, #tpu.memory_space<vmem>>, vector<64x32xf32>
    %c0_1 = arith.constant 0 : index
    %c0_2 = arith.constant 0 : index
    %1 = vector.load %arg1[%c0_1, %c0_2] : memref<32x256xf32, #tpu.memory_space<vmem>>, vector<32x256xf32>
    %cst = arith.constant dense<0.000000e+00> : vector<64x256xf32>
    %2 = tpu.matmul %0, %1, %cst {dimension_numbers = #tpu.dot_dimension_numbers<[1], [0], [0], [1], [0, 0, 1, 1], [], []>} : vector<64x32xf32>, vector<32x256xf32>, vector<64x256xf32> -> vector<64x256xf32>
    %c0_3 = arith.constant 0 : index
    %c0_4 = arith.constant 0 : index
    %3 = vector.load %arg3[%c0_3, %c0_4] : memref<1x256xf32, #tpu.memory_space<vmem>>, vector<1x256xf32>
    %4 = vector.broadcast %3 : vector<1x256xf32> to vector<64x256xf32>
    %5 = arith.addf %2, %4 : vector<64x256xf32>
    %c0_5 = arith.constant 0 : index
    %c0_6 = arith.constant 0 : index
    %6 = vector.load %arg2[%c0_5, %c0_6] : memref<64x256xf32, #tpu.memory_space<vmem>>, vector<64x256xf32>
    %cst_7 = arith.constant 0.000000e+00 : f32
    %7 = vector.broadcast %cst_7 : f32 to vector<8x64xf32>
    %cst_8 = arith.constant 0.000000e+00 : f32
    %8 = vector.broadcast %cst_8 : f32 to vector<8x64xf32>
    %9 = vector.extract_strided_slice %5 {offsets = [0, 0], sizes = [8, 256], strides = [1, 1]} : vector<64x256xf32> to vector<8x256xf32>
    %cst_9 = arith.constant dense<0.000000e+00> : vector<8x256xf32>
    %10 = tpu.matmul %7, %6, %cst_9 {dimension_numbers = #tpu.dot_dimension_numbers<[1], [0], [0], [1], [0, 0, 1, 1], [], []>} : vector<8x64xf32>, vector<64x256xf32>, vector<8x256xf32> -> vector<8x256xf32>
    %11 = arith.addf %9, %10 : vector<8x256xf32>
    %12 = arith.negf %11 : vector<8x256xf32>
    %13 = math.exp %12 : vector<8x256xf32>
    %cst_10 = arith.constant 1.000000e+00 : f32
    %14 = vector.broadcast %cst_10 : f32 to vector<8x256xf32>
    %15 = arith.addf %14, %13 : vector<8x256xf32>
    %16 = arith.divf %14, %15 : vector<8x256xf32>
    %17 = vector.extract_strided_slice %16 {offsets = [0, 0], sizes = [8, 64], strides = [1, 1]} : vector<8x256xf32> to vector<8x64xf32>
    %18 = vector.extract_strided_slice %16 {offsets = [0, 64], sizes = [8, 64], strides = [1, 1]} : vector<8x256xf32> to vector<8x64xf32>
    %19 = vector.extract_strided_slice %16 {offsets = [0, 128], sizes = [8, 64], strides = [1, 1]} : vector<8x256xf32> to vector<8x64xf32>
    %20 = vector.extract_strided_slice %16 {offsets = [0, 192], sizes = [8, 64], strides = [1, 1]} : vector<8x256xf32> to vector<8x64xf32>
    %cst_11 = arith.constant 2.000000e+00 : f32
    %21 = vector.broadcast %cst_11 : f32 to vector<8x64xf32>
    %22 = arith.mulf %21, %20 : vector<8x64xf32>
    %cst_12 = arith.constant 1.000000e+00 : f32
    %23 = vector.broadcast %cst_12 : f32 to vector<8x64xf32>
    %24 = arith.subf %22, %23 : vector<8x64xf32>
    %25 = arith.mulf %18, %8 : vector<8x64xf32>
    %26 = arith.mulf %17, %24 : vector<8x64xf32>
    %27 = arith.addf %25, %26 : vector<8x64xf32>
    %28 = math.tanh %27 : vector<8x64xf32>
    %29 = arith.mulf %19, %28 : vector<8x64xf32>
    %30 = vector.extract_strided_slice %5 {offsets = [8, 0], sizes = [8, 256], strides = [1, 1]} : vector<64x256xf32> to vector<8x256xf32>
    %cst_13 = arith.constant dense<0.000000e+00> : vector<8x256xf32>
    %31 = tpu.matmul %29, %6, %cst_13 {dimension_numbers = #tpu.dot_dimension_numbers<[1], [0], [0], [1], [0, 0, 1, 1], [], []>} : vector<8x64xf32>, vector<64x256xf32>, vector<8x256xf32> -> vector<8x256xf32>
    %32 = arith.addf %30, %31 : vector<8x256xf32>
    %33 = arith.negf %32 : vector<8x256xf32>
    %34 = math.exp %33 : vector<8x256xf32>
    %cst_14 = arith.constant 1.000000e+00 : f32
    %35 = vector.broadcast %cst_14 : f32 to vector<8x256xf32>
    %36 = arith.addf %35, %34 : vector<8x256xf32>
    %37 = arith.divf %35, %36 : vector<8x256xf32>
    %38 = vector.extract_strided_slice %37 {offsets = [0, 0], sizes = [8, 64], strides = [1, 1]} : vector<8x256xf32> to vector<8x64xf32>
    %39 = vector.extract_strided_slice %37 {offsets = [0, 64], sizes = [8, 64], strides = [1, 1]} : vector<8x256xf32> to vector<8x64xf32>
    %40 = vector.extract_strided_slice %37 {offsets = [0, 128], sizes = [8, 64], strides = [1, 1]} : vector<8x256xf32> to vector<8x64xf32>
    %41 = vector.extract_strided_slice %37 {offsets = [0, 192], sizes = [8, 64], strides = [1, 1]} : vector<8x256xf32> to vector<8x64xf32>
    %cst_15 = arith.constant 2.000000e+00 : f32
    %42 = vector.broadcast %cst_15 : f32 to vector<8x64xf32>
    %43 = arith.mulf %42, %41 : vector<8x64xf32>
    %cst_16 = arith.constant 1.000000e+00 : f32
    %44 = vector.broadcast %cst_16 : f32 to vector<8x64xf32>
    %45 = arith.subf %43, %44 : vector<8x64xf32>
    %46 = arith.mulf %39, %27 : vector<8x64xf32>
    %47 = arith.mulf %38, %45 : vector<8x64xf32>
    %48 = arith.addf %46, %47 : vector<8x64xf32>
    %49 = math.tanh %48 : vector<8x64xf32>
    %50 = arith.mulf %40, %49 : vector<8x64xf32>
    %51 = vector.extract_strided_slice %5 {offsets = [16, 0], sizes = [8, 256], strides = [1, 1]} : vector<64x256xf32> to vector<8x256xf32>
    %cst_17 = arith.constant dense<0.000000e+00> : vector<8x256xf32>
    %52 = tpu.matmul %50, %6, %cst_17 {dimension_numbers = #tpu.dot_dimension_numbers<[1], [0], [0], [1], [0, 0, 1, 1], [], []>} : vector<8x64xf32>, vector<64x256xf32>, vector<8x256xf32> -> vector<8x256xf32>
    %53 = arith.addf %51, %52 : vector<8x256xf32>
    %54 = arith.negf %53 : vector<8x256xf32>
    %55 = math.exp %54 : vector<8x256xf32>
    %cst_18 = arith.constant 1.000000e+00 : f32
    %56 = vector.broadcast %cst_18 : f32 to vector<8x256xf32>
    %57 = arith.addf %56, %55 : vector<8x256xf32>
    %58 = arith.divf %56, %57 : vector<8x256xf32>
    %59 = vector.extract_strided_slice %58 {offsets = [0, 0], sizes = [8, 64], strides = [1, 1]} : vector<8x256xf32> to vector<8x64xf32>
    %60 = vector.extract_strided_slice %58 {offsets = [0, 64], sizes = [8, 64], strides = [1, 1]} : vector<8x256xf32> to vector<8x64xf32>
    %61 = vector.extract_strided_slice %58 {offsets = [0, 128], sizes = [8, 64], strides = [1, 1]} : vector<8x256xf32> to vector<8x64xf32>
    %62 = vector.extract_strided_slice %58 {offsets = [0, 192], sizes = [8, 64], strides = [1, 1]} : vector<8x256xf32> to vector<8x64xf32>
    %cst_19 = arith.constant 2.000000e+00 : f32
    %63 = vector.broadcast %cst_19 : f32 to vector<8x64xf32>
    %64 = arith.mulf %63, %62 : vector<8x64xf32>
    %cst_20 = arith.constant 1.000000e+00 : f32
    %65 = vector.broadcast %cst_20 : f32 to vector<8x64xf32>
    %66 = arith.subf %64, %65 : vector<8x64xf32>
    %67 = arith.mulf %60, %48 : vector<8x64xf32>
    %68 = arith.mulf %59, %66 : vector<8x64xf32>
    %69 = arith.addf %67, %68 : vector<8x64xf32>
    %70 = math.tanh %69 : vector<8x64xf32>
    %71 = arith.mulf %61, %70 : vector<8x64xf32>
    %72 = vector.extract_strided_slice %5 {offsets = [24, 0], sizes = [8, 256], strides = [1, 1]} : vector<64x256xf32> to vector<8x256xf32>
    %cst_21 = arith.constant dense<0.000000e+00> : vector<8x256xf32>
    %73 = tpu.matmul %71, %6, %cst_21 {dimension_numbers = #tpu.dot_dimension_numbers<[1], [0], [0], [1], [0, 0, 1, 1], [], []>} : vector<8x64xf32>, vector<64x256xf32>, vector<8x256xf32> -> vector<8x256xf32>
    %74 = arith.addf %72, %73 : vector<8x256xf32>
    %75 = arith.negf %74 : vector<8x256xf32>
    %76 = math.exp %75 : vector<8x256xf32>
    %cst_22 = arith.constant 1.000000e+00 : f32
    %77 = vector.broadcast %cst_22 : f32 to vector<8x256xf32>
    %78 = arith.addf %77, %76 : vector<8x256xf32>
    %79 = arith.divf %77, %78 : vector<8x256xf32>
    %80 = vector.extract_strided_slice %79 {offsets = [0, 0], sizes = [8, 64], strides = [1, 1]} : vector<8x256xf32> to vector<8x64xf32>
    %81 = vector.extract_strided_slice %79 {offsets = [0, 64], sizes = [8, 64], strides = [1, 1]} : vector<8x256xf32> to vector<8x64xf32>
    %82 = vector.extract_strided_slice %79 {offsets = [0, 128], sizes = [8, 64], strides = [1, 1]} : vector<8x256xf32> to vector<8x64xf32>
    %83 = vector.extract_strided_slice %79 {offsets = [0, 192], sizes = [8, 64], strides = [1, 1]} : vector<8x256xf32> to vector<8x64xf32>
    %cst_23 = arith.constant 2.000000e+00 : f32
    %84 = vector.broadcast %cst_23 : f32 to vector<8x64xf32>
    %85 = arith.mulf %84, %83 : vector<8x64xf32>
    %cst_24 = arith.constant 1.000000e+00 : f32
    %86 = vector.broadcast %cst_24 : f32 to vector<8x64xf32>
    %87 = arith.subf %85, %86 : vector<8x64xf32>
    %88 = arith.mulf %81, %69 : vector<8x64xf32>
    %89 = arith.mulf %80, %87 : vector<8x64xf32>
    %90 = arith.addf %88, %89 : vector<8x64xf32>
    %91 = math.tanh %90 : vector<8x64xf32>
    %92 = arith.mulf %82, %91 : vector<8x64xf32>
    %93 = vector.extract_strided_slice %5 {offsets = [32, 0], sizes = [8, 256], strides = [1, 1]} : vector<64x256xf32> to vector<8x256xf32>
    %cst_25 = arith.constant dense<0.000000e+00> : vector<8x256xf32>
    %94 = tpu.matmul %92, %6, %cst_25 {dimension_numbers = #tpu.dot_dimension_numbers<[1], [0], [0], [1], [0, 0, 1, 1], [], []>} : vector<8x64xf32>, vector<64x256xf32>, vector<8x256xf32> -> vector<8x256xf32>
    %95 = arith.addf %93, %94 : vector<8x256xf32>
    %96 = arith.negf %95 : vector<8x256xf32>
    %97 = math.exp %96 : vector<8x256xf32>
    %cst_26 = arith.constant 1.000000e+00 : f32
    %98 = vector.broadcast %cst_26 : f32 to vector<8x256xf32>
    %99 = arith.addf %98, %97 : vector<8x256xf32>
    %100 = arith.divf %98, %99 : vector<8x256xf32>
    %101 = vector.extract_strided_slice %100 {offsets = [0, 0], sizes = [8, 64], strides = [1, 1]} : vector<8x256xf32> to vector<8x64xf32>
    %102 = vector.extract_strided_slice %100 {offsets = [0, 64], sizes = [8, 64], strides = [1, 1]} : vector<8x256xf32> to vector<8x64xf32>
    %103 = vector.extract_strided_slice %100 {offsets = [0, 128], sizes = [8, 64], strides = [1, 1]} : vector<8x256xf32> to vector<8x64xf32>
    %104 = vector.extract_strided_slice %100 {offsets = [0, 192], sizes = [8, 64], strides = [1, 1]} : vector<8x256xf32> to vector<8x64xf32>
    %cst_27 = arith.constant 2.000000e+00 : f32
    %105 = vector.broadcast %cst_27 : f32 to vector<8x64xf32>
    %106 = arith.mulf %105, %104 : vector<8x64xf32>
    %cst_28 = arith.constant 1.000000e+00 : f32
    %107 = vector.broadcast %cst_28 : f32 to vector<8x64xf32>
    %108 = arith.subf %106, %107 : vector<8x64xf32>
    %109 = arith.mulf %102, %90 : vector<8x64xf32>
    %110 = arith.mulf %101, %108 : vector<8x64xf32>
    %111 = arith.addf %109, %110 : vector<8x64xf32>
    %112 = math.tanh %111 : vector<8x64xf32>
    %113 = arith.mulf %103, %112 : vector<8x64xf32>
    %114 = vector.extract_strided_slice %5 {offsets = [40, 0], sizes = [8, 256], strides = [1, 1]} : vector<64x256xf32> to vector<8x256xf32>
    %cst_29 = arith.constant dense<0.000000e+00> : vector<8x256xf32>
    %115 = tpu.matmul %113, %6, %cst_29 {dimension_numbers = #tpu.dot_dimension_numbers<[1], [0], [0], [1], [0, 0, 1, 1], [], []>} : vector<8x64xf32>, vector<64x256xf32>, vector<8x256xf32> -> vector<8x256xf32>
    %116 = arith.addf %114, %115 : vector<8x256xf32>
    %117 = arith.negf %116 : vector<8x256xf32>
    %118 = math.exp %117 : vector<8x256xf32>
    %cst_30 = arith.constant 1.000000e+00 : f32
    %119 = vector.broadcast %cst_30 : f32 to vector<8x256xf32>
    %120 = arith.addf %119, %118 : vector<8x256xf32>
    %121 = arith.divf %119, %120 : vector<8x256xf32>
    %122 = vector.extract_strided_slice %121 {offsets = [0, 0], sizes = [8, 64], strides = [1, 1]} : vector<8x256xf32> to vector<8x64xf32>
    %123 = vector.extract_strided_slice %121 {offsets = [0, 64], sizes = [8, 64], strides = [1, 1]} : vector<8x256xf32> to vector<8x64xf32>
    %124 = vector.extract_strided_slice %121 {offsets = [0, 128], sizes = [8, 64], strides = [1, 1]} : vector<8x256xf32> to vector<8x64xf32>
    %125 = vector.extract_strided_slice %121 {offsets = [0, 192], sizes = [8, 64], strides = [1, 1]} : vector<8x256xf32> to vector<8x64xf32>
    %cst_31 = arith.constant 2.000000e+00 : f32
    %126 = vector.broadcast %cst_31 : f32 to vector<8x64xf32>
    %127 = arith.mulf %126, %125 : vector<8x64xf32>
    %cst_32 = arith.constant 1.000000e+00 : f32
    %128 = vector.broadcast %cst_32 : f32 to vector<8x64xf32>
    %129 = arith.subf %127, %128 : vector<8x64xf32>
    %130 = arith.mulf %123, %111 : vector<8x64xf32>
    %131 = arith.mulf %122, %129 : vector<8x64xf32>
    %132 = arith.addf %130, %131 : vector<8x64xf32>
    %133 = math.tanh %132 : vector<8x64xf32>
    %134 = arith.mulf %124, %133 : vector<8x64xf32>
    %135 = vector.extract_strided_slice %5 {offsets = [48, 0], sizes = [8, 256], strides = [1, 1]} : vector<64x256xf32> to vector<8x256xf32>
    %cst_33 = arith.constant dense<0.000000e+00> : vector<8x256xf32>
    %136 = tpu.matmul %134, %6, %cst_33 {dimension_numbers = #tpu.dot_dimension_numbers<[1], [0], [0], [1], [0, 0, 1, 1], [], []>} : vector<8x64xf32>, vector<64x256xf32>, vector<8x256xf32> -> vector<8x256xf32>
    %137 = arith.addf %135, %136 : vector<8x256xf32>
    %138 = arith.negf %137 : vector<8x256xf32>
    %139 = math.exp %138 : vector<8x256xf32>
    %cst_34 = arith.constant 1.000000e+00 : f32
    %140 = vector.broadcast %cst_34 : f32 to vector<8x256xf32>
    %141 = arith.addf %140, %139 : vector<8x256xf32>
    %142 = arith.divf %140, %141 : vector<8x256xf32>
    %143 = vector.extract_strided_slice %142 {offsets = [0, 0], sizes = [8, 64], strides = [1, 1]} : vector<8x256xf32> to vector<8x64xf32>
    %144 = vector.extract_strided_slice %142 {offsets = [0, 64], sizes = [8, 64], strides = [1, 1]} : vector<8x256xf32> to vector<8x64xf32>
    %145 = vector.extract_strided_slice %142 {offsets = [0, 128], sizes = [8, 64], strides = [1, 1]} : vector<8x256xf32> to vector<8x64xf32>
    %146 = vector.extract_strided_slice %142 {offsets = [0, 192], sizes = [8, 64], strides = [1, 1]} : vector<8x256xf32> to vector<8x64xf32>
    %cst_35 = arith.constant 2.000000e+00 : f32
    %147 = vector.broadcast %cst_35 : f32 to vector<8x64xf32>
    %148 = arith.mulf %147, %146 : vector<8x64xf32>
    %cst_36 = arith.constant 1.000000e+00 : f32
    %149 = vector.broadcast %cst_36 : f32 to vector<8x64xf32>
    %150 = arith.subf %148, %149 : vector<8x64xf32>
    %151 = arith.mulf %144, %132 : vector<8x64xf32>
    %152 = arith.mulf %143, %150 : vector<8x64xf32>
    %153 = arith.addf %151, %152 : vector<8x64xf32>
    %154 = math.tanh %153 : vector<8x64xf32>
    %155 = arith.mulf %145, %154 : vector<8x64xf32>
    %156 = vector.extract_strided_slice %5 {offsets = [56, 0], sizes = [8, 256], strides = [1, 1]} : vector<64x256xf32> to vector<8x256xf32>
    %cst_37 = arith.constant dense<0.000000e+00> : vector<8x256xf32>
    %157 = tpu.matmul %155, %6, %cst_37 {dimension_numbers = #tpu.dot_dimension_numbers<[1], [0], [0], [1], [0, 0, 1, 1], [], []>} : vector<8x64xf32>, vector<64x256xf32>, vector<8x256xf32> -> vector<8x256xf32>
    %158 = arith.addf %156, %157 : vector<8x256xf32>
    %159 = arith.negf %158 : vector<8x256xf32>
    %160 = math.exp %159 : vector<8x256xf32>
    %cst_38 = arith.constant 1.000000e+00 : f32
    %161 = vector.broadcast %cst_38 : f32 to vector<8x256xf32>
    %162 = arith.addf %161, %160 : vector<8x256xf32>
    %163 = arith.divf %161, %162 : vector<8x256xf32>
    %164 = vector.extract_strided_slice %163 {offsets = [0, 0], sizes = [8, 64], strides = [1, 1]} : vector<8x256xf32> to vector<8x64xf32>
    %165 = vector.extract_strided_slice %163 {offsets = [0, 64], sizes = [8, 64], strides = [1, 1]} : vector<8x256xf32> to vector<8x64xf32>
    %166 = vector.extract_strided_slice %163 {offsets = [0, 128], sizes = [8, 64], strides = [1, 1]} : vector<8x256xf32> to vector<8x64xf32>
    %167 = vector.extract_strided_slice %163 {offsets = [0, 192], sizes = [8, 64], strides = [1, 1]} : vector<8x256xf32> to vector<8x64xf32>
    %cst_39 = arith.constant 2.000000e+00 : f32
    %168 = vector.broadcast %cst_39 : f32 to vector<8x64xf32>
    %169 = arith.mulf %168, %167 : vector<8x64xf32>
    %cst_40 = arith.constant 1.000000e+00 : f32
    %170 = vector.broadcast %cst_40 : f32 to vector<8x64xf32>
    %171 = arith.subf %169, %170 : vector<8x64xf32>
    %172 = arith.mulf %165, %153 : vector<8x64xf32>
    %173 = arith.mulf %164, %171 : vector<8x64xf32>
    %174 = arith.addf %172, %173 : vector<8x64xf32>
    %175 = math.tanh %174 : vector<8x64xf32>
    %176 = arith.mulf %166, %175 : vector<8x64xf32>
    %c0_41 = arith.constant 0 : index
    %c0_42 = arith.constant 0 : index
    %177 = vector.load %arg4[%c0_41, %c0_42] : memref<64x16xf32, #tpu.memory_space<vmem>>, vector<64x16xf32>
    %cst_43 = arith.constant dense<0.000000e+00> : vector<8x16xf32>
    %178 = tpu.matmul %176, %177, %cst_43 {dimension_numbers = #tpu.dot_dimension_numbers<[1], [0], [0], [1], [0, 0, 1, 1], [], []>} : vector<8x64xf32>, vector<64x16xf32>, vector<8x16xf32> -> vector<8x16xf32>
    %c0_44 = arith.constant 0 : index
    %c0_45 = arith.constant 0 : index
    %179 = vector.load %arg5[%c0_44, %c0_45] : memref<1x16xf32, #tpu.memory_space<vmem>>, vector<1x16xf32>
    %180 = vector.broadcast %179 : vector<1x16xf32> to vector<8x16xf32>
    %181 = arith.addf %178, %180 : vector<8x16xf32>
    %c0_46 = arith.constant 0 : index
    %c0_47 = arith.constant 0 : index
    %182 = vector.load %arg6[%c0_46, %c0_47] : memref<8x16xf32, #tpu.memory_space<vmem>>, vector<8x16xf32>
    tpu.vector_store %arg6[%c0_46, %c0_47], %181 {strides = array<i32>} : memref<8x16xf32, #tpu.memory_space<vmem>>, vector<8x16xf32>,
    return
  }
}

</mosaic_0001>

<llo_original>
// kernel: tpu_custom_call.1
$region0: #{tpu_custom_call.1}
  #allocation0 [shape = 'u32[]', space=smem, size = 0x4, offset = 0x4, fixed_abs, tag = 'smem constant byte address 0x4 - core index']
  #allocation1 [shape = 'u32[144,128]{1,0:T(1,128)}', space=vmem, size = 0x12000, scoped, tag = 'internal scratch']
  %s0 = inlined_call_operand.vmem [shape: f32[64,32], index: 0, kind: input, shape index: {}]
  %s1 = inlined_call_operand.hbm [shape: f32[32,256], index: 1, kind: input, shape index: {}]
  %s2 = inlined_call_operand.vmem [shape: f32[64,256], index: 2, kind: input, shape index: {}]
  %s3 = inlined_call_operand.vmem [shape: f32[1,256], index: 3, kind: input, shape index: {}]
  %s4 = inlined_call_operand.vmem [shape: f32[64,16], index: 4, kind: input, shape index: {}]
  %s5 = inlined_call_operand.vmem [shape: f32[1,16], index: 5, kind: input, shape index: {}]
  %s6 = inlined_call_operand.hbm [shape: f32[8,16], index: 6, kind: output, shape index: {}]
  %s7 = sld [smem:[#allocation0]]
  $region38: #{tpu_custom_call.1} parent=0
    _
  %s9 = ssub.s32 1, %s7
  %s10 = scalar_select 0, %s9, %s7
  $region1: #{tpu_custom_call.1} parent=0
    #allocation2 [shape = 'u8[32768]{0}', space=vmem, size = 0x8000, scoped, tag = 'input window, operand 1, single buffered']
    #allocation3 [shape = 's32[1]{0}', space=sflag, size = 0x4, scoped, tag = 'scoped memory for tpu_custom_call.1']
    #allocation4 [shape = 's32[1]{0}', space=sflag, size = 0x4, scoped, tag = 'scoped memory for tpu_custom_call.1']
    #allocation5 [shape = 'u8[4096]{0}', space=vmem, size = 0x1000, scoped, tag = 'output window, operand 0, single buffered']
    %11 = vsyncpa [#allocation3], 0
    %12 = vsyncpa [#allocation4], 0
    // Predicated region
    $region2: #{tpu_custom_call.1} parent=1 // pred_check
      _
    $region3: #{tpu_custom_call.1} parent=1 // pred_check_branch
      %14 = sbr.rel (0) target = $region5
    $region4: #{tpu_custom_call.1} parent=1 // pred_region
      _
    $region5: #{tpu_custom_call.1} parent=1 // pred_fallthru
      _
    // Predicated region
    $region6: #{tpu_custom_call.1} parent=1 // pred_check
      _
    $region7: #{tpu_custom_call.1} parent=1 // pred_check_branch
      %16 = sbr.rel (0) target = $region9
    $region8: #{tpu_custom_call.1} parent=1 // pred_region
      %s18 = ssub.s32 1024, 1024
      %19 = vsyncadd [#allocation3], %s18
      %s20 = sshll.u32 [#allocation2], 4
      %s21 = int_to_ptr.vmem [resolvable:$true] %s20
      %26 = dma.hbm_to_vmem [thread:$0]  %s1, 1024, %s21, [#allocation3], 256, 256, 16
    $region9: #{tpu_custom_call.1} parent=1 // pred_fallthru
      _
    // Predicated region
    $region10: #{tpu_custom_call.1} parent=1 // pred_check
      _
    $region11: #{tpu_custom_call.1} parent=1 // pred_check_branch
      %28 = sbr.rel (0) target = $region13
    $region12: #{tpu_custom_call.1} parent=1 // pred_region
      _
    $region13: #{tpu_custom_call.1} parent=1 // pred_fallthru
      _
    // Predicated region
    $region14: #{tpu_custom_call.1} parent=1 // pred_check
      _
    $region15: #{tpu_custom_call.1} parent=1 // pred_check_branch
      %30 = sbr.rel (0) target = $region17
    $region16: #{tpu_custom_call.1} parent=1 // pred_region
      _
    $region17: #{tpu_custom_call.1} parent=1 // pred_fallthru
      _
    // Predicated region
    $region18: #{tpu_custom_call.1} parent=1 // pred_check
      _
    $region19: #{tpu_custom_call.1} parent=1 // pred_check_branch
      %32 = sbr.rel (0) target = $region21
    $region20: #{tpu_custom_call.1} parent=1 // pred_region
      _
    $region21: #{tpu_custom_call.1} parent=1 // pred_fallthru
      _
    // Predicated region
    $region22: #{tpu_custom_call.1} parent=1 // pred_check
      _
    $region23: #{tpu_custom_call.1} parent=1 // pred_check_branch
      %34 = sbr.rel (0) target = $region25
    $region24: #{tpu_custom_call.1} parent=1 // pred_region
      _
    $region25: #{tpu_custom_call.1} parent=1 // pred_fallthru
      _
    // Predicated region
    $region26: #{tpu_custom_call.1} parent=1 // pred_check
      _
    $region27: #{tpu_custom_call.1} parent=1 // pred_check_branch
      %36 = sbr.rel (0) target = $region29
    $region28: #{tpu_custom_call.1} parent=1 // pred_region
      %37 = dma.done [#allocation3], 1024
    $region29: #{tpu_custom_call.1} parent=1 // pred_fallthru
      _
    %v38 = vld [vmem:[%s0] sm:$0xff]
    %v39 = vld [vmem:[%s0 + $0x8] sm:$0xff]
    %v40 = vld [vmem:[%s0 + $0x10] sm:$0xff]
    %v41 = vld [vmem:[%s0 + $0x18] sm:$0xff]
    %v42 = vld [vmem:[%s0 + $0x20] sm:$0xff]
    %v43 = vld [vmem:[%s0 + $0x28] sm:$0xff]
    %v44 = vld [vmem:[%s0 + $0x30] sm:$0xff]
    %v45 = vld [vmem:[%s0 + $0x38] sm:$0xff]
    %v46 = vld [vmem:[#allocation2] sm:$0xff]
    %v47 = vld [vmem:[#allocation2 + $0x8] sm:$0xff]
    %v48 = vld [vmem:[#allocation2 + $0x10] sm:$0xff]
    %v49 = vld [vmem:[#allocation2 + $0x18] sm:$0xff]
    %v50 = vld [vmem:[#allocation2 + $0x20] sm:$0xff]
    %v51 = vld [vmem:[#allocation2 + $0x28] sm:$0xff]
    %v52 = vld [vmem:[#allocation2 + $0x30] sm:$0xff]
    %v53 = vld [vmem:[#allocation2 + $0x38] sm:$0xff]
    %v54 = vld [vmem:[%s3] sm:$0x3]
    %v56 = vlaneseq
    %v57 = vshrl.u32 %v56, 7
    %v58 = vsub.s32 0, %v57
    %v59 = vrot.slane %v54, %v58
    %v60 = vlaneseq
    %v61 = vshrl.u32 %v60, 7
    %v62 = vsub.s32 1, %v61
    %v63 = vrot.slane %v54, %v62
    %vm66 = vcmask 261120
    %v68 = vsel %vm66, %v38, 0
    %v71 = vsel %vm66, %v39, 0
    %v74 = vsel %vm66, %v40, 0
    %v77 = vsel %vm66, %v41, 0
    %v80 = vsel %vm66, %v42, 0
    %v83 = vsel %vm66, %v43, 0
    %v86 = vsel %vm66, %v44, 0
    %v89 = vsel %vm66, %v45, 0
    %91 = vmatprep.subr.mxu0 %v47
    %92 = vmatpush1.msra.mxu0 %v46
    %93 = vmatprep.subr.mxu0 %v49
    %94 = vmatpush1.msra.mxu0 %v48
    %95 = vmatprep.subr.mxu0 %v51
    %96 = vmatpush1.msra.mxu0 %v50
    %97 = vmatprep.subr.mxu0 %v53
    %98 = vmatpush1.msra.mxu0 %v52
    %99 = vmatprep.subr.mxu0 0.0
    %100 = vmatpush1.msra.mxu0 0.0
    %101 = vmatprep.subr.mxu0 0.0
    %102 = vmatpush1.msra.mxu0 0.0
    %103 = vmatprep.subr.mxu0 0.0
    %104 = vmatpush1.msra.mxu0 0.0
    %105 = vmatprep.subr.mxu0 0.0
    %106 = vmatpush1.msra.mxu0 0.0
    %107 = vmatprep.subr.mxu0 0.0
    %108 = vmatpush1.msra.mxu0 0.0
    %109 = vmatprep.subr.mxu0 0.0
    %110 = vmatpush1.msra.mxu0 0.0
    %111 = vmatprep.subr.mxu0 0.0
    %112 = vmatpush1.msra.mxu0 0.0
    %113 = vmatprep.subr.mxu0 0.0
    %114 = vmatpush1.msra.mxu0 0.0
    %115 = vmatprep.subr.mxu0 0.0
    %116 = vmatpush1.msra.mxu0 0.0
    %117 = vmatprep.subr.mxu0 0.0
    %118 = vmatpush1.msra.mxu0 0.0
    %119 = vmatprep.subr.mxu0 0.0
    %120 = vmatpush1.msra.mxu0 0.0
    %121 = vmatprep.subr.mxu0 0.0
    %122 = vmatpush1.msra.mxu0 0.0
    %123 = vmatprep.subr.mxu0 0.0
    %124 = vmatpush1.msra.mxu0 0.0
    %125 = vmatprep.subr.mxu0 0.0
    %126 = vmatpush1.msra.mxu0 0.0
    %127 = vmatprep.subr.mxu0 0.0
    %128 = vmatpush1.msra.mxu0 0.0
    %129 = vmatprep.subr.mxu0 0.0
    %130 = vmatpush1.msra.mxu0 0.0
    %131 = vmatprep.subr.mxu0 0.0
    %132 = vmatpush1.msra.mxu0 0.0
    %133 = vmatprep.subr.mxu0 0.0
    %134 = vmatpush1.msra.mxu0 0.0
    %135 = vmatprep.subr.mxu0 0.0
    %136 = vmatpush1.msra.mxu0 0.0
    %137 = vmatprep.subr.mxu0 0.0
    %138 = vmatpush1.msra.mxu0 0.0
    %139 = vmatprep.subr.mxu0 0.0
    %140 = vmatpush1.msra.mxu0 0.0
    %141 = vmatprep.subr.mxu0 0.0
    %142 = vmatpush1.msra.mxu0 0.0
    %143 = vmatprep.subr.mxu0 0.0
    %144 = vmatpush1.msra.mxu0 0.0
    %145 = vmatprep.subr.mxu0 0.0
    %146 = vmatpush1.msra.mxu0 0.0
    %147 = vmatprep.subr.mxu0 0.0
    %148 = vmatpush1.msra.mxu0 0.0
    %149 = vmatprep.subr.mxu0 0.0
    %150 = vmatpush1.msra.mxu0 0.0
    %151 = vmatprep.subr.mxu0 0.0
    %152 = vmatpush1.msra.mxu0 0.0
    %153 = vmatprep.subr.mxu0 0.0
    %154 = vmatpush1.msra.mxu0 0.0
    %155 = vmatprep.mubr.f32.mxu0 0.0
    %156 = vmatmul.mubr.f32.gmra.mrb[0].mxu0 %v68
    %v157 = vpop.f32.mrb[0].mxu0
    %v158 = vadd.f32 %v59, %v157
    %v159 = vpop.f32.mrb[0].mxu0
    %v160 = vadd.f32 %v63, %v159
    %161 = vmatprep.mubr.f32.mxu0 0.0
    %162 = vmatmul.mubr.f32.gmra.mrb[0].mxu0 %v71
    %v163 = vpop.f32.mrb[0].mxu0
    %v164 = vadd.f32 %v59, %v163
    %v165 = vpop.f32.mrb[0].mxu0
    %v166 = vadd.f32 %v63, %v165
    %167 = vmatprep.mubr.f32.mxu0 0.0
    %168 = vmatmul.mubr.f32.gmra.mrb[0].mxu0 %v74
    %v169 = vpop.f32.mrb[0].mxu0
    %v170 = vadd.f32 %v59, %v169
    %v171 = vpop.f32.mrb[0].mxu0
    %v172 = vadd.f32 %v63, %v171
    %173 = vmatprep.mubr.f32.mxu0 0.0
    %174 = vmatmul.mubr.f32.gmra.mrb[0].mxu0 %v77
    %v175 = vpop.f32.mrb[0].mxu0
    %v176 = vadd.f32 %v59, %v175
    %v177 = vpop.f32.mrb[0].mxu0
    %v178 = vadd.f32 %v63, %v177
    %179 = vmatprep.mubr.f32.mxu0 0.0
    %180 = vmatmul.mubr.f32.gmra.mrb[0].mxu0 %v80
    %v181 = vpop.f32.mrb[0].mxu0
    %v182 = vadd.f32 %v59, %v181
    %v183 = vpop.f32.mrb[0].mxu0
    %v184 = vadd.f32 %v63, %v183
    %185 = vmatprep.mubr.f32.mxu0 0.0
    %186 = vmatmul.mubr.f32.gmra.mrb[0].mxu0 %v83
    %v187 = vpop.f32.mrb[0].mxu0
    %v188 = vadd.f32 %v59, %v187
    %v189 = vpop.f32.mrb[0].mxu0
    %v190 = vadd.f32 %v63, %v189
    %191 = vmatprep.mubr.f32.mxu0 0.0
    %192 = vmatmul.mubr.f32.gmra.mrb[0].mxu0 %v86
    %v193 = vpop.f32.mrb[0].mxu0
    %v194 = vadd.f32 %v59, %v193
    %v195 = vpop.f32.mrb[0].mxu0
    %v196 = vadd.f32 %v63, %v195
    %197 = vmatprep.mubr.f32.mxu0 0.0
    %198 = vmatmul.mubr.f32.gmra.mrb[0].mxu0 %v89
    %v199 = vpop.f32.mrb[0].mxu0
    %v200 = vadd.f32 %v59, %v199
    %v201 = vpop.f32.mrb[0].mxu0
    %v202 = vadd.f32 %v63, %v201
    %203 = vdwg.mxu0
    %v204 = vld [vmem:[%s2] sm:$0xff]
    %v205 = vld [vmem:[%s2 + $0x8] sm:$0xff]
    %v206 = vld [vmem:[%s2 + $0x10] sm:$0xff]
    %v207 = vld [vmem:[%s2 + $0x18] sm:$0xff]
    %v208 = vld [vmem:[%s2 + $0x20] sm:$0xff]
    %v209 = vld [vmem:[%s2 + $0x28] sm:$0xff]
    %v210 = vld [vmem:[%s2 + $0x30] sm:$0xff]
    %v211 = vld [vmem:[%s2 + $0x38] sm:$0xff]
    %v212 = vld [vmem:[%s2 + $0x40] sm:$0xff]
    %v213 = vld [vmem:[%s2 + $0x48] sm:$0xff]
    %v214 = vld [vmem:[%s2 + $0x50] sm:$0xff]
    %v215 = vld [vmem:[%s2 + $0x58] sm:$0xff]
    %v216 = vld [vmem:[%s2 + $0x60] sm:$0xff]
    %v217 = vld [vmem:[%s2 + $0x68] sm:$0xff]
    %v218 = vld [vmem:[%s2 + $0x70] sm:$0xff]
    %v219 = vld [vmem:[%s2 + $0x78] sm:$0xff]
    %vm220 = vcmask 523264
    %v222 = vsel %vm220, 0.0, 0
    %224 = vmatprep.subr.mxu0 %v205
    %225 = vmatpush1.msra.mxu0 %v204
    %226 = vmatprep.subr.mxu0 %v207
    %227 = vmatpush1.msra.mxu0 %v206
    %228 = vmatprep.subr.mxu0 %v209
    %229 = vmatpush1.msra.mxu0 %v208
    %230 = vmatprep.subr.mxu0 %v211
    %231 = vmatpush1.msra.mxu0 %v210
    %232 = vmatprep.subr.mxu0 %v213
    %233 = vmatpush1.msra.mxu0 %v212
    %234 = vmatprep.subr.mxu0 %v215
    %235 = vmatpush1.msra.mxu0 %v214
    %236 = vmatprep.subr.mxu0 %v217
    %237 = vmatpush1.msra.mxu0 %v216
    %238 = vmatprep.subr.mxu0 %v219
    %239 = vmatpush1.msra.mxu0 %v218
    %240 = vmatprep.subr.mxu0 0.0
    %241 = vmatpush1.msra.mxu0 0.0
    %242 = vmatprep.subr.mxu0 0.0
    %243 = vmatpush1.msra.mxu0 0.0
    %244 = vmatprep.subr.mxu0 0.0
    %245 = vmatpush1.msra.mxu0 0.0
    %246 = vmatprep.subr.mxu0 0.0
    %247 = vmatpush1.msra.mxu0 0.0
    %248 = vmatprep.subr.mxu0 0.0
    %249 = vmatpush1.msra.mxu0 0.0
    %250 = vmatprep.subr.mxu0 0.0
    %251 = vmatpush1.msra.mxu0 0.0
    %252 = vmatprep.subr.mxu0 0.0
    %253 = vmatpush1.msra.mxu0 0.0
    %254 = vmatprep.subr.mxu0 0.0
    %255 = vmatpush1.msra.mxu0 0.0
    %256 = vmatprep.subr.mxu0 0.0
    %257 = vmatpush1.msra.mxu0 0.0
    %258 = vmatprep.subr.mxu0 0.0
    %259 = vmatpush1.msra.mxu0 0.0
    %260 = vmatprep.subr.mxu0 0.0
    %261 = vmatpush1.msra.mxu0 0.0
    %262 = vmatprep.subr.mxu0 0.0
    %263 = vmatpush1.msra.mxu0 0.0
    %264 = vmatprep.subr.mxu0 0.0
    %265 = vmatpush1.msra.mxu0 0.0
    %266 = vmatprep.subr.mxu0 0.0
    %267 = vmatpush1.msra.mxu0 0.0
    %268 = vmatprep.subr.mxu0 0.0
    %269 = vmatpush1.msra.mxu0 0.0
    %270 = vmatprep.subr.mxu0 0.0
    %271 = vmatpush1.msra.mxu0 0.0
    %272 = vmatprep.subr.mxu0 0.0
    %273 = vmatpush1.msra.mxu0 0.0
    %274 = vmatprep.subr.mxu0 0.0
    %275 = vmatpush1.msra.mxu0 0.0
    %276 = vmatprep.subr.mxu0 0.0
    %277 = vmatpush1.msra.mxu0 0.0
    %278 = vmatprep.subr.mxu0 0.0
    %279 = vmatpush1.msra.mxu0 0.0
    %280 = vmatprep.subr.mxu0 0.0
    %281 = vmatpush1.msra.mxu0 0.0
    %282 = vmatprep.subr.mxu0 0.0
    %283 = vmatpush1.msra.mxu0 0.0
    %284 = vmatprep.subr.mxu0 0.0
    %285 = vmatpush1.msra.mxu0 0.0
    %286 = vmatprep.subr.mxu0 0.0
    %287 = vmatpush1.msra.mxu0 0.0
    %288 = vmatprep.mubr.f32.mxu0 0.0
    %289 = vmatmul.mubr.f32.gmra.mrb[0].mxu0 %v222
    %v290 = vpop.f32.mrb[0].mxu0
    %v291 = vadd.f32 0.0, %v290
    %v292 = vpop.f32.mrb[0].mxu0
    %v293 = vadd.f32 0.0, %v292
    %294 = vdwg.mxu0
    %v295 = vadd.f32 %v158, %v291
    %v296 = vadd.f32 %v160, %v293
    %v297 = vxor.u32 %v295, 2147483648
    %v298 = vxor.u32 %v296, 2147483648
    %v299 = vmul.f32 %v297, 1.442695
    %v300 = vpow.pop %v299
    %v301 = vmul.f32 %v298, 1.442695
    %v302 = vpow.pop %v301
    %v303 = vadd.f32 %v300, 1.0
    %v304 = vadd.f32 %v302, 1.0
    %v305 = vrcp.pop %v303
    %v306 = vmul.f32 1.0, %v305
    %v307 = vrcp.pop %v304
    %v308 = vmul.f32 1.0, %v307
    %v309 = vmul.f32 %v308, 2.0
    %v310 = vsub.f32 %v309, 1.0
    %v311 = vmul.f32 %v306, 0.0
    %313 = vrot.lane.b32.xlu0 %v310, 64
    %v314 = vpop.permute.xlu0 %313
    %v316 = vmul.f32 %v306, %v314
    %318 = vrot.lane.b32.xlu0 %v316, 64
    %v319 = vpop.permute.xlu0 %318
    %v321 = vadd.f32 %v311, %v319
    %v322 = vtanh.pop %v321
    %324 = vrot.lane.b32.xlu0 %v322, 64
    %v325 = vpop.permute.xlu0 %324
    %v327 = vmul.f32 %v308, %v325
    %v329 = vsel %vm220, %v327, 0
    %331 = vmatprep.subr.mxu0 %v205
    %332 = vmatpush1.msra.mxu0 %v204
    %333 = vmatprep.subr.mxu0 %v207
    %334 = vmatpush1.msra.mxu0 %v206
    %335 = vmatprep.subr.mxu0 %v209
    %336 = vmatpush1.msra.mxu0 %v208
    %337 = vmatprep.subr.mxu0 %v211
    %338 = vmatpush1.msra.mxu0 %v210
    %339 = vmatprep.subr.mxu0 %v213
    %340 = vmatpush1.msra.mxu0 %v212
    %341 = vmatprep.subr.mxu0 %v215
    %342 = vmatpush1.msra.mxu0 %v214
    %343 = vmatprep.subr.mxu0 %v217
    %344 = vmatpush1.msra.mxu0 %v216
    %345 = vmatprep.subr.mxu0 %v219
    %346 = vmatpush1.msra.mxu0 %v218
    %347 = vmatprep.subr.mxu0 0.0
    %348 = vmatpush1.msra.mxu0 0.0
    %349 = vmatprep.subr.mxu0 0.0
    %350 = vmatpush1.msra.mxu0 0.0
    %351 = vmatprep.subr.mxu0 0.0
    %352 = vmatpush1.msra.mxu0 0.0
    %353 = vmatprep.subr.mxu0 0.0
    %354 = vmatpush1.msra.mxu0 0.0
    %355 = vmatprep.subr.mxu0 0.0
    %356 = vmatpush1.msra.mxu0 0.0
    %357 = vmatprep.subr.mxu0 0.0
    %358 = vmatpush1.msra.mxu0 0.0
    %359 = vmatprep.subr.mxu0 0.0
    %360 = vmatpush1.msra.mxu0 0.0
    %361 = vmatprep.subr.mxu0 0.0
    %362 = vmatpush1.msra.mxu0 0.0
    %363 = vmatprep.subr.mxu0 0.0
    %364 = vmatpush1.msra.mxu0 0.0
    %365 = vmatprep.subr.mxu0 0.0
    %366 = vmatpush1.msra.mxu0 0.0
    %367 = vmatprep.subr.mxu0 0.0
    %368 = vmatpush1.msra.mxu0 0.0
    %369 = vmatprep.subr.mxu0 0.0
    %370 = vmatpush1.msra.mxu0 0.0
    %371 = vmatprep.subr.mxu0 0.0
    %372 = vmatpush1.msra.mxu0 0.0
    %373 = vmatprep.subr.mxu0 0.0
    %374 = vmatpush1.msra.mxu0 0.0
    %375 = vmatprep.subr.mxu0 0.0
    %376 = vmatpush1.msra.mxu0 0.0
    %377 = vmatprep.subr.mxu0 0.0
    %378 = vmatpush1.msra.mxu0 0.0
    %379 = vmatprep.subr.mxu0 0.0
    %380 = vmatpush1.msra.mxu0 0.0
    %381 = vmatprep.subr.mxu0 0.0
    %382 = vmatpush1.msra.mxu0 0.0
    %383 = vmatprep.subr.mxu0 0.0
    %384 = vmatpush1.msra.mxu0 0.0
    %385 = vmatprep.subr.mxu0 0.0
    %386 = vmatpush1.msra.mxu0 0.0
    %387 = vmatprep.subr.mxu0 0.0
    %388 = vmatpush1.msra.mxu0 0.0
    %389 = vmatprep.subr.mxu0 0.0
    %390 = vmatpush1.msra.mxu0 0.0
    %391 = vmatprep.subr.mxu0 0.0
    %392 = vmatpush1.msra.mxu0 0.0
    %393 = vmatprep.subr.mxu0 0.0
    %394 = vmatpush1.msra.mxu0 0.0
    %395 = vmatprep.mubr.f32.mxu0 0.0
    %396 = vmatmul.mubr.f32.gmra.mrb[0].mxu0 %v329
    %v397 = vpop.f32.mrb[0].mxu0
    %v398 = vadd.f32 0.0, %v397
    %v399 = vpop.f32.mrb[0].mxu0
    %v400 = vadd.f32 0.0, %v399
    %401 = vdwg.mxu0
    %v402 = vadd.f32 %v164, %v398
    %v403 = vadd.f32 %v166, %v400
    %v404 = vxor.u32 %v402, 2147483648
    %v405 = vxor.u32 %v403, 2147483648
    %v406 = vmul.f32 %v404, 1.442695
    %v407 = vpow.pop %v406
    %v408 = vmul.f32 %v405, 1.442695
    %v409 = vpow.pop %v408
    %v410 = vadd.f32 %v407, 1.0
    %v411 = vadd.f32 %v409, 1.0
    %v412 = vrcp.pop %v410
    %v413 = vmul.f32 1.0, %v412
    %v414 = vrcp.pop %v411
    %v415 = vmul.f32 1.0, %v414
    %v416 = vmul.f32 %v415, 2.0
    %v417 = vsub.f32 %v416, 1.0
    %v418 = vmul.f32 %v413, %v321
    %420 = vrot.lane.b32.xlu0 %v417, 64
    %v421 = vpop.permute.xlu0 %420
    %v423 = vmul.f32 %v413, %v421
    %425 = vrot.lane.b32.xlu0 %v423, 64
    %v426 = vpop.permute.xlu0 %425
    %v428 = vadd.f32 %v418, %v426
    %v429 = vtanh.pop %v428
    %431 = vrot.lane.b32.xlu0 %v429, 64
    %v432 = vpop.permute.xlu0 %431
    %v434 = vmul.f32 %v415, %v432
    %v436 = vsel %vm220, %v434, 0
    %438 = vmatprep.subr.mxu0 %v205
    %439 = vmatpush1.msra.mxu0 %v204
    %440 = vmatprep.subr.mxu0 %v207
    %441 = vmatpush1.msra.mxu0 %v206
    %442 = vmatprep.subr.mxu0 %v209
    %443 = vmatpush1.msra.mxu0 %v208
    %444 = vmatprep.subr.mxu0 %v211
    %445 = vmatpush1.msra.mxu0 %v210
    %446 = vmatprep.subr.mxu0 %v213
    %447 = vmatpush1.msra.mxu0 %v212
    %448 = vmatprep.subr.mxu0 %v215
    %449 = vmatpush1.msra.mxu0 %v214
    %450 = vmatprep.subr.mxu0 %v217
    %451 = vmatpush1.msra.mxu0 %v216
    %452 = vmatprep.subr.mxu0 %v219
    %453 = vmatpush1.msra.mxu0 %v218
    %454 = vmatprep.subr.mxu0 0.0
    %455 = vmatpush1.msra.mxu0 0.0
    %456 = vmatprep.subr.mxu0 0.0
    %457 = vmatpush1.msra.mxu0 0.0
    %458 = vmatprep.subr.mxu0 0.0
    %459 = vmatpush1.msra.mxu0 0.0
    %460 = vmatprep.subr.mxu0 0.0
    %461 = vmatpush1.msra.mxu0 0.0
    %462 = vmatprep.subr.mxu0 0.0
    %463 = vmatpush1.msra.mxu0 0.0
    %464 = vmatprep.subr.mxu0 0.0
    %465 = vmatpush1.msra.mxu0 0.0
    %466 = vmatprep.subr.mxu0 0.0
    %467 = vmatpush1.msra.mxu0 0.0
    %468 = vmatprep.subr.mxu0 0.0
    %469 = vmatpush1.msra.mxu0 0.0
    %470 = vmatprep.subr.mxu0 0.0
    %471 = vmatpush1.msra.mxu0 0.0
    %472 = vmatprep.subr.mxu0 0.0
    %473 = vmatpush1.msra.mxu0 0.0
    %474 = vmatprep.subr.mxu0 0.0
    %475 = vmatpush1.msra.mxu0 0.0
    %476 = vmatprep.subr.mxu0 0.0
    %477 = vmatpush1.msra.mxu0 0.0
    %478 = vmatprep.subr.mxu0 0.0
    %479 = vmatpush1.msra.mxu0 0.0
    %480 = vmatprep.subr.mxu0 0.0
    %481 = vmatpush1.msra.mxu0 0.0
    %482 = vmatprep.subr.mxu0 0.0
    %483 = vmatpush1.msra.mxu0 0.0
    %484 = vmatprep.subr.mxu0 0.0
    %485 = vmatpush1.msra.mxu0 0.0
    %486 = vmatprep.subr.mxu0 0.0
    %487 = vmatpush1.msra.mxu0 0.0
    %488 = vmatprep.subr.mxu0 0.0
    %489 = vmatpush1.msra.mxu0 0.0
    %490 = vmatprep.subr.mxu0 0.0
    %491 = vmatpush1.msra.mxu0 0.0
    %492 = vmatprep.subr.mxu0 0.0
    %493 = vmatpush1.msra.mxu0 0.0
    %494 = vmatprep.subr.mxu0 0.0
    %495 = vmatpush1.msra.mxu0 0.0
    %496 = vmatprep.subr.mxu0 0.0
    %497 = vmatpush1.msra.mxu0 0.0
    %498 = vmatprep.subr.mxu0 0.0
    %499 = vmatpush1.msra.mxu0 0.0
    %500 = vmatprep.subr.mxu0 0.0
    %501 = vmatpush1.msra.mxu0 0.0
    %502 = vmatprep.mubr.f32.mxu0 0.0
    %503 = vmatmul.mubr.f32.gmra.mrb[0].mxu0 %v436
    %v504 = vpop.f32.mrb[0].mxu0
    %v505 = vadd.f32 0.0, %v504
    %v506 = vpop.f32.mrb[0].mxu0
    %v507 = vadd.f32 0.0, %v506
    %508 = vdwg.mxu0
    %v509 = vadd.f32 %v170, %v505
    %v510 = vadd.f32 %v172, %v507
    %v511 = vxor.u32 %v509, 2147483648
    %v512 = vxor.u32 %v510, 2147483648
    %v513 = vmul.f32 %v511, 1.442695
    %v514 = vpow.pop %v513
    %v515 = vmul.f32 %v512, 1.442695
    %v516 = vpow.pop %v515
    %v517 = vadd.f32 %v514, 1.0
    %v518 = vadd.f32 %v516, 1.0
    %v519 = vrcp.pop %v517
    %v520 = vmul.f32 1.0, %v519
    %v521 = vrcp.pop %v518
    %v522 = vmul.f32 1.0, %v521
    %v523 = vmul.f32 %v522, 2.0
    %v524 = vsub.f32 %v523, 1.0
    %v525 = vmul.f32 %v520, %v428
    %527 = vrot.lane.b32.xlu0 %v524, 64
    %v528 = vpop.permute.xlu0 %527
    %v530 = vmul.f32 %v520, %v528
    %532 = vrot.lane.b32.xlu0 %v530, 64
    %v533 = vpop.permute.xlu0 %532
    %v535 = vadd.f32 %v525, %v533
    %v536 = vtanh.pop %v535
    %538 = vrot.lane.b32.xlu0 %v536, 64
    %v539 = vpop.permute.xlu0 %538
    %v541 = vmul.f32 %v522, %v539
    %v543 = vsel %vm220, %v541, 0
    %545 = vmatprep.subr.mxu0 %v205
    %546 = vmatpush1.msra.mxu0 %v204
    %547 = vmatprep.subr.mxu0 %v207
    %548 = vmatpush1.msra.mxu0 %v206
    %549 = vmatprep.subr.mxu0 %v209
    %550 = vmatpush1.msra.mxu0 %v208
    %551 = vmatprep.subr.mxu0 %v211
    %552 = vmatpush1.msra.mxu0 %v210
    %553 = vmatprep.subr.mxu0 %v213
    %554 = vmatpush1.msra.mxu0 %v212
    %555 = vmatprep.subr.mxu0 %v215
    %556 = vmatpush1.msra.mxu0 %v214
    %557 = vmatprep.subr.mxu0 %v217
    %558 = vmatpush1.msra.mxu0 %v216
    %559 = vmatprep.subr.mxu0 %v219
    %560 = vmatpush1.msra.mxu0 %v218
    %561 = vmatprep.subr.mxu0 0.0
    %562 = vmatpush1.msra.mxu0 0.0
    %563 = vmatprep.subr.mxu0 0.0
    %564 = vmatpush1.msra.mxu0 0.0
    %565 = vmatprep.subr.mxu0 0.0
    %566 = vmatpush1.msra.mxu0 0.0
    %567 = vmatprep.subr.mxu0 0.0
    %568 = vmatpush1.msra.mxu0 0.0
    %569 = vmatprep.subr.mxu0 0.0
    %570 = vmatpush1.msra.mxu0 0.0
    %571 = vmatprep.subr.mxu0 0.0
    %572 = vmatpush1.msra.mxu0 0.0
    %573 = vmatprep.subr.mxu0 0.0
    %574 = vmatpush1.msra.mxu0 0.0
    %575 = vmatprep.subr.mxu0 0.0
    %576 = vmatpush1.msra.mxu0 0.0
    %577 = vmatprep.subr.mxu0 0.0
    %578 = vmatpush1.msra.mxu0 0.0
    %579 = vmatprep.subr.mxu0 0.0
    %580 = vmatpush1.msra.mxu0 0.0
    %581 = vmatprep.subr.mxu0 0.0
    %582 = vmatpush1.msra.mxu0 0.0
    %583 = vmatprep.subr.mxu0 0.0
    %584 = vmatpush1.msra.mxu0 0.0
    %585 = vmatprep.subr.mxu0 0.0
    %586 = vmatpush1.msra.mxu0 0.0
    %587 = vmatprep.subr.mxu0 0.0
    %588 = vmatpush1.msra.mxu0 0.0
    %589 = vmatprep.subr.mxu0 0.0
    %590 = vmatpush1.msra.mxu0 0.0
    %591 = vmatprep.subr.mxu0 0.0
    %592 = vmatpush1.msra.mxu0 0.0
    %593 = vmatprep.subr.mxu0 0.0
    %594 = vmatpush1.msra.mxu0 0.0
    %595 = vmatprep.subr.mxu0 0.0
    %596 = vmatpush1.msra.mxu0 0.0
    %597 = vmatprep.subr.mxu0 0.0
    %598 = vmatpush1.msra.mxu0 0.0
    %599 = vmatprep.subr.mxu0 0.0
    %600 = vmatpush1.msra.mxu0 0.0
    %601 = vmatprep.subr.mxu0 0.0
    %602 = vmatpush1.msra.mxu0 0.0
    %603 = vmatprep.subr.mxu0 0.0
    %604 = vmatpush1.msra.mxu0 0.0
    %605 = vmatprep.subr.mxu0 0.0
    %606 = vmatpush1.msra.mxu0 0.0
    %607 = vmatprep.subr.mxu0 0.0
    %608 = vmatpush1.msra.mxu0 0.0
    %609 = vmatprep.mubr.f32.mxu0 0.0
    %610 = vmatmul.mubr.f32.gmra.mrb[0].mxu0 %v543
    %v611 = vpop.f32.mrb[0].mxu0
    %v612 = vadd.f32 0.0, %v611
    %v613 = vpop.f32.mrb[0].mxu0
    %v614 = vadd.f32 0.0, %v613
    %615 = vdwg.mxu0
    %v616 = vadd.f32 %v176, %v612
    %v617 = vadd.f32 %v178, %v614
    %v618 = vxor.u32 %v616, 2147483648
    %v619 = vxor.u32 %v617, 2147483648
    %v620 = vmul.f32 %v618, 1.442695
    %v621 = vpow.pop %v620
    %v622 = vmul.f32 %v619, 1.442695
    %v623 = vpow.pop %v622
    %v624 = vadd.f32 %v621, 1.0
    %v625 = vadd.f32 %v623, 1.0
    %v626 = vrcp.pop %v624
    %v627 = vmul.f32 1.0, %v626
    %v628 = vrcp.pop %v625
    %v629 = vmul.f32 1.0, %v628
    %v630 = vmul.f32 %v629, 2.0
    %v631 = vsub.f32 %v630, 1.0
    %v632 = vmul.f32 %v627, %v535
    %634 = vrot.lane.b32.xlu0 %v631, 64
    %v635 = vpop.permute.xlu0 %634
    %v637 = vmul.f32 %v627, %v635
    %639 = vrot.lane.b32.xlu0 %v637, 64
    %v640 = vpop.permute.xlu0 %639
    %v642 = vadd.f32 %v632, %v640
    %v643 = vtanh.pop %v642
    %645 = vrot.lane.b32.xlu0 %v643, 64
    %v646 = vpop.permute.xlu0 %645
    %v648 = vmul.f32 %v629, %v646
    %v650 = vsel %vm220, %v648, 0
    %652 = vmatprep.subr.mxu0 %v205
    %653 = vmatpush1.msra.mxu0 %v204
    %654 = vmatprep.subr.mxu0 %v207
    %655 = vmatpush1.msra.mxu0 %v206
    %656 = vmatprep.subr.mxu0 %v209
    %657 = vmatpush1.msra.mxu0 %v208
    %658 = vmatprep.subr.mxu0 %v211
    %659 = vmatpush1.msra.mxu0 %v210
    %660 = vmatprep.subr.mxu0 %v213
    %661 = vmatpush1.msra.mxu0 %v212
    %662 = vmatprep.subr.mxu0 %v215
    %663 = vmatpush1.msra.mxu0 %v214
    %664 = vmatprep.subr.mxu0 %v217
    %665 = vmatpush1.msra.mxu0 %v216
    %666 = vmatprep.subr.mxu0 %v219
    %667 = vmatpush1.msra.mxu0 %v218
    %668 = vmatprep.subr.mxu0 0.0
    %669 = vmatpush1.msra.mxu0 0.0
    %670 = vmatprep.subr.mxu0 0.0
    %671 = vmatpush1.msra.mxu0 0.0
    %672 = vmatprep.subr.mxu0 0.0
    %673 = vmatpush1.msra.mxu0 0.0
    %674 = vmatprep.subr.mxu0 0.0
    %675 = vmatpush1.msra.mxu0 0.0
    %676 = vmatprep.subr.mxu0 0.0
    %677 = vmatpush1.msra.mxu0 0.0
    %678 = vmatprep.subr.mxu0 0.0
    %679 = vmatpush1.msra.mxu0 0.0
    %680 = vmatprep.subr.mxu0 0.0
    %681 = vmatpush1.msra.mxu0 0.0
    %682 = vmatprep.subr.mxu0 0.0
    %683 = vmatpush1.msra.mxu0 0.0
    %684 = vmatprep.subr.mxu0 0.0
    %685 = vmatpush1.msra.mxu0 0.0
    %686 = vmatprep.subr.mxu0 0.0
    %687 = vmatpush1.msra.mxu0 0.0
    %688 = vmatprep.subr.mxu0 0.0
    %689 = vmatpush1.msra.mxu0 0.0
    %690 = vmatprep.subr.mxu0 0.0
    %691 = vmatpush1.msra.mxu0 0.0
    %692 = vmatprep.subr.mxu0 0.0
    %693 = vmatpush1.msra.mxu0 0.0
    %694 = vmatprep.subr.mxu0 0.0
    %695 = vmatpush1.msra.mxu0 0.0
    %696 = vmatprep.subr.mxu0 0.0
    %697 = vmatpush1.msra.mxu0 0.0
    %698 = vmatprep.subr.mxu0 0.0
    %699 = vmatpush1.msra.mxu0 0.0
    %700 = vmatprep.subr.mxu0 0.0
    %701 = vmatpush1.msra.mxu0 0.0
    %702 = vmatprep.subr.mxu0 0.0
    %703 = vmatpush1.msra.mxu0 0.0
    %704 = vmatprep.subr.mxu0 0.0
    %705 = vmatpush1.msra.mxu0 0.0
    %706 = vmatprep.subr.mxu0 0.0
    %707 = vmatpush1.msra.mxu0 0.0
    %708 = vmatprep.subr.mxu0 0.0
    %709 = vmatpush1.msra.mxu0 0.0
    %710 = vmatprep.subr.mxu0 0.0
    %711 = vmatpush1.msra.mxu0 0.0
    %712 = vmatprep.subr.mxu0 0.0
    %713 = vmatpush1.msra.mxu0 0.0
    %714 = vmatprep.subr.mxu0 0.0
    %715 = vmatpush1.msra.mxu0 0.0
    %716 = vmatprep.mubr.f32.mxu0 0.0
    %717 = vmatmul.mubr.f32.gmra.mrb[0].mxu0 %v650
    %v718 = vpop.f32.mrb[0].mxu0
    %v719 = vadd.f32 0.0, %v718
    %v720 = vpop.f32.mrb[0].mxu0
    %v721 = vadd.f32 0.0, %v720
    %722 = vdwg.mxu0
    %v723 = vadd.f32 %v182, %v719
    %v724 = vadd.f32 %v184, %v721
    %v725 = vxor.u32 %v723, 2147483648
    %v726 = vxor.u32 %v724, 2147483648
    %v727 = vmul.f32 %v725, 1.442695
    %v728 = vpow.pop %v727
    %v729 = vmul.f32 %v726, 1.442695
    %v730 = vpow.pop %v729
    %v731 = vadd.f32 %v728, 1.0
    %v732 = vadd.f32 %v730, 1.0
    %v733 = vrcp.pop %v731
    %v734 = vmul.f32 1.0, %v733
    %v735 = vrcp.pop %v732
    %v736 = vmul.f32 1.0, %v735
    %v737 = vmul.f32 %v736, 2.0
    %v738 = vsub.f32 %v737, 1.0
    %v739 = vmul.f32 %v734, %v642
    %741 = vrot.lane.b32.xlu0 %v738, 64
    %v742 = vpop.permute.xlu0 %741
    %v744 = vmul.f32 %v734, %v742
    %746 = vrot.lane.b32.xlu0 %v744, 64
    %v747 = vpop.permute.xlu0 %746
    %v749 = vadd.f32 %v739, %v747
    %v750 = vtanh.pop %v749
    %752 = vrot.lane.b32.xlu0 %v750, 64
    %v753 = vpop.permute.xlu0 %752
    %v755 = vmul.f32 %v736, %v753
    %v757 = vsel %vm220, %v755, 0
    %759 = vmatprep.subr.mxu0 %v205
    %760 = vmatpush1.msra.mxu0 %v204
    %761 = vmatprep.subr.mxu0 %v207
    %762 = vmatpush1.msra.mxu0 %v206
    %763 = vmatprep.subr.mxu0 %v209
    %764 = vmatpush1.msra.mxu0 %v208
    %765 = vmatprep.subr.mxu0 %v211
    %766 = vmatpush1.msra.mxu0 %v210
    %767 = vmatprep.subr.mxu0 %v213
    %768 = vmatpush1.msra.mxu0 %v212
    %769 = vmatprep.subr.mxu0 %v215
    %770 = vmatpush1.msra.mxu0 %v214
    %771 = vmatprep.subr.mxu0 %v217
    %772 = vmatpush1.msra.mxu0 %v216
    %773 = vmatprep.subr.mxu0 %v219
    %774 = vmatpush1.msra.mxu0 %v218
    %775 = vmatprep.subr.mxu0 0.0
    %776 = vmatpush1.msra.mxu0 0.0
    %777 = vmatprep.subr.mxu0 0.0
    %778 = vmatpush1.msra.mxu0 0.0
    %779 = vmatprep.subr.mxu0 0.0
    %780 = vmatpush1.msra.mxu0 0.0
    %781 = vmatprep.subr.mxu0 0.0
    %782 = vmatpush1.msra.mxu0 0.0
    %783 = vmatprep.subr.mxu0 0.0
    %784 = vmatpush1.msra.mxu0 0.0
    %785 = vmatprep.subr.mxu0 0.0
    %786 = vmatpush1.msra.mxu0 0.0
    %787 = vmatprep.subr.mxu0 0.0
    %788 = vmatpush1.msra.mxu0 0.0
    %789 = vmatprep.subr.mxu0 0.0
    %790 = vmatpush1.msra.mxu0 0.0
    %791 = vmatprep.subr.mxu0 0.0
    %792 = vmatpush1.msra.mxu0 0.0
    %793 = vmatprep.subr.mxu0 0.0
    %794 = vmatpush1.msra.mxu0 0.0
    %795 = vmatprep.subr.mxu0 0.0
    %796 = vmatpush1.msra.mxu0 0.0
    %797 = vmatprep.subr.mxu0 0.0
    %798 = vmatpush1.msra.mxu0 0.0
    %799 = vmatprep.subr.mxu0 0.0
    %800 = vmatpush1.msra.mxu0 0.0
    %801 = vmatprep.subr.mxu0 0.0
    %802 = vmatpush1.msra.mxu0 0.0
    %803 = vmatprep.subr.mxu0 0.0
    %804 = vmatpush1.msra.mxu0 0.0
    %805 = vmatprep.subr.mxu0 0.0
    %806 = vmatpush1.msra.mxu0 0.0
    %807 = vmatprep.subr.mxu0 0.0
    %808 = vmatpush1.msra.mxu0 0.0
    %809 = vmatprep.subr.mxu0 0.0
    %810 = vmatpush1.msra.mxu0 0.0
    %811 = vmatprep.subr.mxu0 0.0
    %812 = vmatpush1.msra.mxu0 0.0
    %813 = vmatprep.subr.mxu0 0.0
    %814 = vmatpush1.msra.mxu0 0.0
    %815 = vmatprep.subr.mxu0 0.0
    %816 = vmatpush1.msra.mxu0 0.0
    %817 = vmatprep.subr.mxu0 0.0
    %818 = vmatpush1.msra.mxu0 0.0
    %819 = vmatprep.subr.mxu0 0.0
    %820 = vmatpush1.msra.mxu0 0.0
    %821 = vmatprep.subr.mxu0 0.0
    %822 = vmatpush1.msra.mxu0 0.0
    %823 = vmatprep.mubr.f32.mxu0 0.0
    %824 = vmatmul.mubr.f32.gmra.mrb[0].mxu0 %v757
    %v825 = vpop.f32.mrb[0].mxu0
    %v826 = vadd.f32 0.0, %v825
    %v827 = vpop.f32.mrb[0].mxu0
    %v828 = vadd.f32 0.0, %v827
    %829 = vdwg.mxu0
    %v830 = vadd.f32 %v188, %v826
    %v831 = vadd.f32 %v190, %v828
    %v832 = vxor.u32 %v830, 2147483648
    %v833 = vxor.u32 %v831, 2147483648
    %v834 = vmul.f32 %v832, 1.442695
    %v835 = vpow.pop %v834
    %v836 = vmul.f32 %v833, 1.442695
    %v837 = vpow.pop %v836
    %v838 = vadd.f32 %v835, 1.0
    %v839 = vadd.f32 %v837, 1.0
    %v840 = vrcp.pop %v838
    %v841 = vmul.f32 1.0, %v840
    %v842 = vrcp.pop %v839
    %v843 = vmul.f32 1.0, %v842
    %v844 = vmul.f32 %v843, 2.0
    %v845 = vsub.f32 %v844, 1.0
    %v846 = vmul.f32 %v841, %v749
    %848 = vrot.lane.b32.xlu0 %v845, 64
    %v849 = vpop.permute.xlu0 %848
    %v851 = vmul.f32 %v841, %v849
    %853 = vrot.lane.b32.xlu0 %v851, 64
    %v854 = vpop.permute.xlu0 %853
    %v856 = vadd.f32 %v846, %v854
    %v857 = vtanh.pop %v856
    %859 = vrot.lane.b32.xlu0 %v857, 64
    %v860 = vpop.permute.xlu0 %859
    %v862 = vmul.f32 %v843, %v860
    %v864 = vsel %vm220, %v862, 0
    %866 = vmatprep.subr.mxu0 %v205
    %867 = vmatpush1.msra.mxu0 %v204
    %868 = vmatprep.subr.mxu0 %v207
    %869 = vmatpush1.msra.mxu0 %v206
    %870 = vmatprep.subr.mxu0 %v209
    %871 = vmatpush1.msra.mxu0 %v208
    %872 = vmatprep.subr.mxu0 %v211
    %873 = vmatpush1.msra.mxu0 %v210
    %874 = vmatprep.subr.mxu0 %v213
    %875 = vmatpush1.msra.mxu0 %v212
    %876 = vmatprep.subr.mxu0 %v215
    %877 = vmatpush1.msra.mxu0 %v214
    %878 = vmatprep.subr.mxu0 %v217
    %879 = vmatpush1.msra.mxu0 %v216
    %880 = vmatprep.subr.mxu0 %v219
    %881 = vmatpush1.msra.mxu0 %v218
    %882 = vmatprep.subr.mxu0 0.0
    %883 = vmatpush1.msra.mxu0 0.0
    %884 = vmatprep.subr.mxu0 0.0
    %885 = vmatpush1.msra.mxu0 0.0
    %886 = vmatprep.subr.mxu0 0.0
    %887 = vmatpush1.msra.mxu0 0.0
    %888 = vmatprep.subr.mxu0 0.0
    %889 = vmatpush1.msra.mxu0 0.0
    %890 = vmatprep.subr.mxu0 0.0
    %891 = vmatpush1.msra.mxu0 0.0
    %892 = vmatprep.subr.mxu0 0.0
    %893 = vmatpush1.msra.mxu0 0.0
    %894 = vmatprep.subr.mxu0 0.0
    %895 = vmatpush1.msra.mxu0 0.0
    %896 = vmatprep.subr.mxu0 0.0
    %897 = vmatpush1.msra.mxu0 0.0
    %898 = vmatprep.subr.mxu0 0.0
    %899 = vmatpush1.msra.mxu0 0.0
    %900 = vmatprep.subr.mxu0 0.0
    %901 = vmatpush1.msra.mxu0 0.0
    %902 = vmatprep.subr.mxu0 0.0
    %903 = vmatpush1.msra.mxu0 0.0
    %904 = vmatprep.subr.mxu0 0.0
    %905 = vmatpush1.msra.mxu0 0.0
    %906 = vmatprep.subr.mxu0 0.0
    %907 = vmatpush1.msra.mxu0 0.0
    %908 = vmatprep.subr.mxu0 0.0
    %909 = vmatpush1.msra.mxu0 0.0
    %910 = vmatprep.subr.mxu0 0.0
    %911 = vmatpush1.msra.mxu0 0.0
    %912 = vmatprep.subr.mxu0 0.0
    %913 = vmatpush1.msra.mxu0 0.0
    %914 = vmatprep.subr.mxu0 0.0
    %915 = vmatpush1.msra.mxu0 0.0
    %916 = vmatprep.subr.mxu0 0.0
    %917 = vmatpush1.msra.mxu0 0.0
    %918 = vmatprep.subr.mxu0 0.0
    %919 = vmatpush1.msra.mxu0 0.0
    %920 = vmatprep.subr.mxu0 0.0
    %921 = vmatpush1.msra.mxu0 0.0
    %922 = vmatprep.subr.mxu0 0.0
    %923 = vmatpush1.msra.mxu0 0.0
    %924 = vmatprep.subr.mxu0 0.0
    %925 = vmatpush1.msra.mxu0 0.0
    %926 = vmatprep.subr.mxu0 0.0
    %927 = vmatpush1.msra.mxu0 0.0
    %928 = vmatprep.subr.mxu0 0.0
    %929 = vmatpush1.msra.mxu0 0.0
    %930 = vmatprep.mubr.f32.mxu0 0.0
    %931 = vmatmul.mubr.f32.gmra.mrb[0].mxu0 %v864
    %v932 = vpop.f32.mrb[0].mxu0
    %v933 = vadd.f32 0.0, %v932
    %v934 = vpop.f32.mrb[0].mxu0
    %v935 = vadd.f32 0.0, %v934
    %936 = vdwg.mxu0
    %v937 = vadd.f32 %v194, %v933
    %v938 = vadd.f32 %v196, %v935
    %v939 = vxor.u32 %v937, 2147483648
    %v940 = vxor.u32 %v938, 2147483648
    %v941 = vmul.f32 %v939, 1.442695
    %v942 = vpow.pop %v941
    %v943 = vmul.f32 %v940, 1.442695
    %v944 = vpow.pop %v943
    %v945 = vadd.f32 %v942, 1.0
    %v946 = vadd.f32 %v944, 1.0
    %v947 = vrcp.pop %v945
    %v948 = vmul.f32 1.0, %v947
    %v949 = vrcp.pop %v946
    %v950 = vmul.f32 1.0, %v949
    %v951 = vmul.f32 %v950, 2.0
    %v952 = vsub.f32 %v951, 1.0
    %v953 = vmul.f32 %v948, %v856
    %955 = vrot.lane.b32.xlu0 %v952, 64
    %v956 = vpop.permute.xlu0 %955
    %v958 = vmul.f32 %v948, %v956
    %960 = vrot.lane.b32.xlu0 %v958, 64
    %v961 = vpop.permute.xlu0 %960
    %v963 = vadd.f32 %v953, %v961
    %v964 = vtanh.pop %v963
    %966 = vrot.lane.b32.xlu0 %v964, 64
    %v967 = vpop.permute.xlu0 %966
    %v969 = vmul.f32 %v950, %v967
    %v971 = vsel %vm220, %v969, 0
    %973 = vmatprep.subr.mxu0 %v205
    %974 = vmatpush1.msra.mxu0 %v204
    %975 = vmatprep.subr.mxu0 %v207
    %976 = vmatpush1.msra.mxu0 %v206
    %977 = vmatprep.subr.mxu0 %v209
    %978 = vmatpush1.msra.mxu0 %v208
    %979 = vmatprep.subr.mxu0 %v211
    %980 = vmatpush1.msra.mxu0 %v210
    %981 = vmatprep.subr.mxu0 %v213
    %982 = vmatpush1.msra.mxu0 %v212
    %983 = vmatprep.subr.mxu0 %v215
    %984 = vmatpush1.msra.mxu0 %v214
    %985 = vmatprep.subr.mxu0 %v217
    %986 = vmatpush1.msra.mxu0 %v216
    %987 = vmatprep.subr.mxu0 %v219
    %988 = vmatpush1.msra.mxu0 %v218
    %989 = vmatprep.subr.mxu0 0.0
    %990 = vmatpush1.msra.mxu0 0.0
    %991 = vmatprep.subr.mxu0 0.0
    %992 = vmatpush1.msra.mxu0 0.0
    %993 = vmatprep.subr.mxu0 0.0
    %994 = vmatpush1.msra.mxu0 0.0
    %995 = vmatprep.subr.mxu0 0.0
    %996 = vmatpush1.msra.mxu0 0.0
    %997 = vmatprep.subr.mxu0 0.0
    %998 = vmatpush1.msra.mxu0 0.0
    %999 = vmatprep.subr.mxu0 0.0
    %1000 = vmatpush1.msra.mxu0 0.0
    %1001 = vmatprep.subr.mxu0 0.0
    %1002 = vmatpush1.msra.mxu0 0.0
    %1003 = vmatprep.subr.mxu0 0.0
    %1004 = vmatpush1.msra.mxu0 0.0
    %1005 = vmatprep.subr.mxu0 0.0
    %1006 = vmatpush1.msra.mxu0 0.0
    %1007 = vmatprep.subr.mxu0 0.0
    %1008 = vmatpush1.msra.mxu0 0.0
    %1009 = vmatprep.subr.mxu0 0.0
    %1010 = vmatpush1.msra.mxu0 0.0
    %1011 = vmatprep.subr.mxu0 0.0
    %1012 = vmatpush1.msra.mxu0 0.0
    %1013 = vmatprep.subr.mxu0 0.0
    %1014 = vmatpush1.msra.mxu0 0.0
    %1015 = vmatprep.subr.mxu0 0.0
    %1016 = vmatpush1.msra.mxu0 0.0
    %1017 = vmatprep.subr.mxu0 0.0
    %1018 = vmatpush1.msra.mxu0 0.0
    %1019 = vmatprep.subr.mxu0 0.0
    %1020 = vmatpush1.msra.mxu0 0.0
    %1021 = vmatprep.subr.mxu0 0.0
    %1022 = vmatpush1.msra.mxu0 0.0
    %1023 = vmatprep.subr.mxu0 0.0
    %1024 = vmatpush1.msra.mxu0 0.0
    %1025 = vmatprep.subr.mxu0 0.0
    %1026 = vmatpush1.msra.mxu0 0.0
    %1027 = vmatprep.subr.mxu0 0.0
    %1028 = vmatpush1.msra.mxu0 0.0
    %1029 = vmatprep.subr.mxu0 0.0
    %1030 = vmatpush1.msra.mxu0 0.0
    %1031 = vmatprep.subr.mxu0 0.0
    %1032 = vmatpush1.msra.mxu0 0.0
    %1033 = vmatprep.subr.mxu0 0.0
    %1034 = vmatpush1.msra.mxu0 0.0
    %1035 = vmatprep.subr.mxu0 0.0
    %1036 = vmatpush1.msra.mxu0 0.0
    %1037 = vmatprep.mubr.f32.mxu0 0.0
    %1038 = vmatmul.mubr.f32.gmra.mrb[0].mxu0 %v971
    %v1039 = vpop.f32.mrb[0].mxu0
    %v1040 = vadd.f32 0.0, %v1039
    %v1041 = vpop.f32.mrb[0].mxu0
    %v1042 = vadd.f32 0.0, %v1041
    %1043 = vdwg.mxu0
    %v1044 = vadd.f32 %v200, %v1040
    %v1045 = vadd.f32 %v202, %v1042
    %v1046 = vxor.u32 %v1044, 2147483648
    %v1047 = vxor.u32 %v1045, 2147483648
    %v1048 = vmul.f32 %v1046, 1.442695
    %v1049 = vpow.pop %v1048
    %v1050 = vmul.f32 %v1047, 1.442695
    %v1051 = vpow.pop %v1050
    %v1052 = vadd.f32 %v1049, 1.0
    %v1053 = vadd.f32 %v1051, 1.0
    %v1054 = vrcp.pop %v1052
    %v1055 = vmul.f32 1.0, %v1054
    %v1056 = vrcp.pop %v1053
    %v1057 = vmul.f32 1.0, %v1056
    %v1058 = vmul.f32 %v1057, 2.0
    %v1059 = vsub.f32 %v1058, 1.0
    %v1060 = vmul.f32 %v1055, %v963
    %1062 = vrot.lane.b32.xlu0 %v1059, 64
    %v1063 = vpop.permute.xlu0 %1062
    %v1065 = vmul.f32 %v1055, %v1063
    %1067 = vrot.lane.b32.xlu0 %v1065, 64
    %v1068 = vpop.permute.xlu0 %1067
    %v1070 = vadd.f32 %v1060, %v1068
    %v1071 = vtanh.pop %v1070
    %1073 = vrot.lane.b32.xlu0 %v1071, 64
    %v1074 = vpop.permute.xlu0 %1073
    %v1076 = vmul.f32 %v1057, %v1074
    %v1077 = vld [vmem:[%s4] sm:$0xff]
    %v1078 = vld [vmem:[%s4 + $0x8] sm:$0xff]
    %v1079 = vld [vmem:[%s4 + $0x10] sm:$0xff]
    %v1080 = vld [vmem:[%s4 + $0x18] sm:$0xff]
    %v1081 = vld [vmem:[%s4 + $0x20] sm:$0xff]
    %v1082 = vld [vmem:[%s4 + $0x28] sm:$0xff]
    %v1083 = vld [vmem:[%s4 + $0x30] sm:$0xff]
    %v1084 = vld [vmem:[%s4 + $0x38] sm:$0xff]
    %v1085 = vld [vmem:[%s5] sm:$0x1]
    %v1087 = vlaneseq
    %v1088 = vshrl.u32 %v1087, 7
    %v1089 = vsub.s32 0, %v1088
    %v1090 = vrot.slane %v1085, %v1089
    %v1093 = vsel %vm220, %v1076, 0
    %1095 = vmatprep.subr.mxu0 0.0
    %1096 = vmatpush1.msra.mxu0 %v1077
    %1097 = vmatprep.subr.mxu0 0.0
    %1098 = vmatpush1.msra.mxu0 %v1078
    %1099 = vmatprep.subr.mxu0 0.0
    %1100 = vmatpush1.msra.mxu0 %v1079
    %1101 = vmatprep.subr.mxu0 0.0
    %1102 = vmatpush1.msra.mxu0 %v1080
    %1103 = vmatprep.subr.mxu0 0.0
    %1104 = vmatpush1.msra.mxu0 %v1081
    %1105 = vmatprep.subr.mxu0 0.0
    %1106 = vmatpush1.msra.mxu0 %v1082
    %1107 = vmatprep.subr.mxu0 0.0
    %1108 = vmatpush1.msra.mxu0 %v1083
    %1109 = vmatprep.subr.mxu0 0.0
    %1110 = vmatpush1.msra.mxu0 %v1084
    %1111 = vmatprep.subr.mxu0 0.0
    %1112 = vmatpush1.msra.mxu0 0.0
    %1113 = vmatprep.subr.mxu0 0.0
    %1114 = vmatpush1.msra.mxu0 0.0
    %1115 = vmatprep.subr.mxu0 0.0
    %1116 = vmatpush1.msra.mxu0 0.0
    %1117 = vmatprep.subr.mxu0 0.0
    %1118 = vmatpush1.msra.mxu0 0.0
    %1119 = vmatprep.subr.mxu0 0.0
    %1120 = vmatpush1.msra.mxu0 0.0
    %1121 = vmatprep.subr.mxu0 0.0
    %1122 = vmatpush1.msra.mxu0 0.0
    %1123 = vmatprep.subr.mxu0 0.0
    %1124 = vmatpush1.msra.mxu0 0.0
    %1125 = vmatprep.subr.mxu0 0.0
    %1126 = vmatpush1.msra.mxu0 0.0
    %1127 = vmatprep.subr.mxu0 0.0
    %1128 = vmatpush1.msra.mxu0 0.0
    %1129 = vmatprep.subr.mxu0 0.0
    %1130 = vmatpush1.msra.mxu0 0.0
    %1131 = vmatprep.subr.mxu0 0.0
    %1132 = vmatpush1.msra.mxu0 0.0
    %1133 = vmatprep.subr.mxu0 0.0
    %1134 = vmatpush1.msra.mxu0 0.0
    %1135 = vmatprep.subr.mxu0 0.0
    %1136 = vmatpush1.msra.mxu0 0.0
    %1137 = vmatprep.subr.mxu0 0.0
    %1138 = vmatpush1.msra.mxu0 0.0
    %1139 = vmatprep.subr.mxu0 0.0
    %1140 = vmatpush1.msra.mxu0 0.0
    %1141 = vmatprep.subr.mxu0 0.0
    %1142 = vmatpush1.msra.mxu0 0.0
    %1143 = vmatprep.subr.mxu0 0.0
    %1144 = vmatpush1.msra.mxu0 0.0
    %1145 = vmatprep.subr.mxu0 0.0
    %1146 = vmatpush1.msra.mxu0 0.0
    %1147 = vmatprep.subr.mxu0 0.0
    %1148 = vmatpush1.msra.mxu0 0.0
    %1149 = vmatprep.subr.mxu0 0.0
    %1150 = vmatpush1.msra.mxu0 0.0
    %1151 = vmatprep.subr.mxu0 0.0
    %1152 = vmatpush1.msra.mxu0 0.0
    %1153 = vmatprep.subr.mxu0 0.0
    %1154 = vmatpush1.msra.mxu0 0.0
    %1155 = vmatprep.subr.mxu0 0.0
    %1156 = vmatpush1.msra.mxu0 0.0
    %1157 = vmatprep.subr.mxu0 0.0
    %1158 = vmatpush1.msra.mxu0 0.0
    %1159 = vmatprep.mubr.f32.mxu0 0.0
    %1160 = vmatmul.mubr.f32.gmra.mrb[0].mxu0 %v1093
    %v1161 = vpop.f32.mrb[0].mxu0
    %v1162 = vadd.f32 %v1090, %v1161
    %v1163 = vpop.f32.mrb[0].mxu0
    %1164 = vdwg.mxu0
    %vm1165 = vcmask 130048
    %1166 = vst.msk [vmem:[#allocation5] sm:$0xff] %vm1165, %v1162
    // Predicated region
    $region30: #{tpu_custom_call.1} parent=1 // pred_check
      _
    $region31: #{tpu_custom_call.1} parent=1 // pred_check_branch
      %1168 = sbr.rel (0) target = $region33
    $region32: #{tpu_custom_call.1} parent=1 // pred_region
      %s1170 = ssub.s32 128, 128
      %1171 = vsyncadd [#allocation4], %s1170
      %s1173 = sshll.u32 [#allocation5], 4
      %s1174 = int_to_ptr.vmem [resolvable:$true] %s1173
      %1176 = dma.vmem_to_hbm [thread:$0]  %s1174, 128, %s6, [#allocation4]
    $region33: #{tpu_custom_call.1} parent=1 // pred_fallthru
      _
    // Predicated region
    $region34: #{tpu_custom_call.1} parent=1 // pred_check
      _
    $region35: #{tpu_custom_call.1} parent=1 // pred_check_branch
      %1178 = sbr.rel (0) target = $region37
    $region36: #{tpu_custom_call.1} parent=1 // pred_region
      %1179 = dma.done [#allocation4], 128
    $region37: #{tpu_custom_call.1} parent=1 // pred_fallthru
      _
    %1180 = vsyncpa [#allocation3], 1
    %1181 = vsyncpa [#allocation4], 1

</llo_original>
